<compile_context>
chip_gen: v5e
topology: v5e:2x2
jax: 0.10.0
libtpu: 0.0.40
codegen_flags: <defaults>
</compile_context>

<pallas_src>
import math
import numpy as np
import jax
import jax.numpy as jnp
from jax.experimental import pallas as pl
from jax.experimental.pallas import tpu as pltpu

F32 = jnp.float32


# ----------------------------------------------------------------------------- helpers
def _silu(x):
    return x * jax.nn.sigmoid(x)


def _softplus(x):
    return jnp.where(x > 20.0, x, jnp.log1p(jnp.exp(jnp.minimum(x, 20.0))))


def _resident(shape):
    """Weight-style input: same block every grid step (fetched once, stays in VMEM)."""
    assert len(shape) == 2
    return pl.BlockSpec(shape, lambda g: (0, 0))


def _rowblock(rows, cols):
    """Per-graph / per-chunk row tile of a 2-D array."""
    return pl.BlockSpec((rows, cols), lambda g: (g, 0))


def _pick_chunk_tokens(n_graphs, npad, max_tokens=64):
    """Largest chunk (multiple of npad, <= max_tokens, dividing the batch) for the scan."""
    per = max(1, min(n_graphs, max_tokens // max(npad, 1)))
    while n_graphs % per:
        per -= 1
    return per * npad


# ----------------------------------------------------------------------------- kernels
def _embed_kernel(h0_ref, w_ref, b_ref, out_ref):
    out_ref[...] = (
        jnp.dot(h0_ref[...], w_ref[...], preferred_element_type=F32) + b_ref[...]
    )


def _gcl_kernel(rs_ref, rd_ref, rst_ref, h_ref, h0_ref, coord_ref, eattr_ref, emask_ref,
                we1_hs_ref, we1_hd_ref, we1_r_ref, we1_e_ref, be1_ref,
                we2_ref, be2_ref,
                wn1_mi_ref, wn1_h_ref, wn1_a_ref, bn1_ref,
                wn2_ref, bn2_ref, gamma_ref, beta_ref,
                out_ref):
    """One E_GCL_mamba layer (minus the mamba block) for ONE graph (grid axis = graph)."""
    Rs = rs_ref[...]        # (np^2, np)  edge -> src selector (constant, VMEM resident)
    Rd = rd_ref[...]        # (np^2, np)  edge -> dst selector
    h = h_ref[...]          # (np, H)
    coord = coord_ref[...]  # (np, 3)

    # coord2radial (pairwise, dense per graph)
    c_src = jnp.dot(Rs, coord, preferred_element_type=F32)
    c_dst = jnp.dot(Rd, coord, preferred_element_type=F32)
    diff = c_src - c_dst
    radial = jnp.sum(diff * diff, axis=-1, keepdims=True)            # (np^2, 1)

    # edge_model: edge_mlp(cat([h[src], h[dst], radial, edge_attr]))  (SiLU, SiLU)
    a_src = jnp.dot(h, we1_hs_ref[...], preferred_element_type=F32)  # project first (cheaper)
    a_dst = jnp.dot(h, we1_hd_ref[...], preferred_element_type=F32)
    e_pre = (jnp.dot(Rs, a_src, preferred_element_type=F32)
             + jnp.dot(Rd, a_dst, preferred_element_type=F32)
             + radial * we1_r_ref[...]
             + jnp.dot(eattr_ref[...], we1_e_ref[...], preferred_element_type=F32)
             + be1_ref[...])
    e_hid = _silu(e_pre)
    edge_feat = _silu(jnp.dot(e_hid, we2_ref[...], preferred_element_type=F32) + be2_ref[...])
    # TODO(synk): E_GCL_mamba.edge_model source unavailable; edge_mask is applied before the
    # per-node aggregation (masked-EGNN semantics for padded graphs / non-edges).
    edge_feat = edge_feat * emask_ref[...]
    mi = jnp.dot(rst_ref[...], edge_feat, preferred_element_type=F32)  # segment_sum over src

    # node_mlp(cat([mi, h, node_attr = h0]))
    n_pre = (jnp.dot(mi, wn1_mi_ref[...], preferred_element_type=F32)
             + jnp.dot(h, wn1_h_ref[...], preferred_element_type=F32)
             + jnp.dot(h0_ref[...], wn1_a_ref[...], preferred_element_type=F32)
             + bn1_ref[...])
    h_new = jnp.dot(_silu(n_pre), wn2_ref[...], preferred_element_type=F32) + bn2_ref[...]

    # pre_norm (LayerNorm over features) + clamp(-10, 10)
    mu = jnp.mean(h_new, axis=-1, keepdims=True)
    var = jnp.mean((h_new - mu) ** 2, axis=-1, keepdims=True)
    h_norm = (h_new - mu) * jax.lax.rsqrt(var + 1e-5) * gamma_ref[...] + beta_ref[...]
    out_ref[...] = jnp.clip(h_norm, -10.0, 10.0)


def _mamba_kernel(h_ref, winx_ref, winz_ref, convw_ref, convb_ref,
                  wxdt_ref, wxB_ref, wxC_ref, wdt_ref, bdt_ref,
                  A_ref, D_ref, wout_ref,
                  out_ref,
                  state_s, tail_s, dA_s, dBx_s, states_s):
    """Mamba block over the whole node batch, chunked along the token/grid axis.

    state_s (d_state, d_inner) and tail_s (8, d_inner) persist across grid steps, so the
    SSM state and the causal conv window flow through the full sequence exactly like the
    reference mamba2(h.unsqueeze(0)).
    """
    c = pl.program_id(0)
    T = h_ref.shape[0]
    dc = convw_ref.shape[0]

    @pl.when(c == 0)
    def _():
        state_s[...] = jnp.zeros_like(state_s)
        tail_s[...] = jnp.zeros_like(tail_s)

    h = h_ref[...]                                                    # (T, H)
    x = jnp.dot(h, winx_ref[...], preferred_element_type=F32)         # (T, d_inner)
    z = jnp.dot(h, winz_ref[...], preferred_element_type=F32)         # (T, d_inner)

    # causal depthwise conv1d: previous-chunk tail + static tap slices (no shift matrices)
    x_ext = jnp.concatenate([tail_s[...], x], axis=0)                 # (8 + T, d_inner)
    tail_s[...] = x[T - 8:, :]                                        # carry raw x window
    cw = convw_ref[...]
    xc = convb_ref[...]                                               # (1, d_inner) bias
    base = 8 - (dc - 1)
    for k in range(dc):
        xc = xc + x_ext[base + k: base + k + T, :] * cw[k:k + 1, :]
    x_conv = _silu(xc)                                                # (T, d_inner)

    dt_low = jnp.dot(x_conv, wxdt_ref[...], preferred_element_type=F32)        # (T, dt_rank)
    dt = _softplus(jnp.dot(dt_low, wdt_ref[...], preferred_element_type=F32) + bdt_ref[...])
    Bm = jnp.dot(x_conv, wxB_ref[...], preferred_element_type=F32)             # (T, d_state)
    Cm = jnp.dot(x_conv, wxC_ref[...], preferred_element_type=F32)             # (T, d_state)

    # chunk-local discretization (exp per chunk, overlapped with the surrounding matmuls)
    A_sd = A_ref[...]                                                 # (d_state, d_inner), < 0
    dA_s[...] = jnp.exp(dt[:, None, :] * A_sd[None, :, :])            # (T, d_state, d_inner)
    dBx_s[...] = (dt * x_conv)[:, None, :] * Bm[:, :, None]           # (T, d_state, d_inner)

    # short unrolled recurrence: pure VPU elementwise work, no tiny MXU ops
    st = state_s[...]
    for t in range(T):
        st = dA_s[t] * st + dBx_s[t]
        states_s[t] = st
    state_s[...] = st

    # y[t] = C[t] . state[t] + D * x_conv[t]   (C-contraction vectorized over the chunk)
    y = jnp.sum(states_s[...] * Cm[:, :, None], axis=1) + D_ref[...] * x_conv
    out_ref[...] = jnp.dot(y * _silu(z), wout_ref[...], preferred_element_type=F32)


def _decode_kernel(h_ref, mask_ref,
                   wd1_ref, bd1_ref, wd2_ref, bd2_ref,
                   wg1_ref, bg1_ref, wg2_ref, bg2_ref,
                   out_ref):
    """node_dec -> mask -> per-graph sum -> graph_dec, one graph per grid step."""
    h = h_ref[...]                                                    # (np, H)
    t = _silu(jnp.dot(h, wd1_ref[...], preferred_element_type=F32) + bd1_ref[...])
    hd = jnp.dot(t, wd2_ref[...], preferred_element_type=F32) + bd2_ref[...]
    hd = hd * mask_ref[...]
    hg = jnp.sum(hd, axis=0, keepdims=True)                           # (1, H) graph pooling
    t2 = _silu(jnp.dot(hg, wg1_ref[...], preferred_element_type=F32) + bg1_ref[...])
    out_ref[...] = jnp.dot(t2, wg2_ref[...], preferred_element_type=F32) + bg2_ref[...]


# ----------------------------------------------------------------------------- parameters
def _linear(key, fan_in, fan_out):
    kw, kb = jax.random.split(key)
    lim = 1.0 / math.sqrt(fan_in)
    w = jax.random.uniform(kw, (fan_in, fan_out), F32, -lim, lim)
    b = jax.random.uniform(kb, (1, fan_out), F32, -lim, lim)
    return w, b


def init_params(key, in_node_nf, in_edge_nf, hidden_nf, n_layers,
                d_state=64, d_conv=4, expand=2):
    H = hidden_nf
    d_inner = expand * H
    dt_rank = math.ceil(H / 16)
    keys = iter(jax.random.split(key, 16 + 16 * n_layers))
    p = {}
    p['w_emb'], p['b_emb'] = _linear(next(keys), in_node_nf, H)

    layers = []
    for _ in range(n_layers):
        lp = {}
        # edge_mlp: Linear(2H + 1 + in_edge_nf, H), SiLU, Linear(H, H), SiLU
        we1, lp['be1'] = _linear(next(keys), 2 * H + 1 + in_edge_nf, H)
        lp['we1_hs'] = we1[:H]
        lp['we1_hd'] = we1[H:2 * H]
        lp['we1_r'] = we1[2 * H:2 * H + 1]
        lp['we1_e'] = we1[2 * H + 1:]
        lp['we2'], lp['be2'] = _linear(next(keys), H, H)
        # node_mlp: Linear(H + H + in_node_nf, H), SiLU, Linear(H, H)
        wn1, lp['bn1'] = _linear(next(keys), 2 * H + in_node_nf, H)
        lp['wn1_mi'] = wn1[:H]
        lp['wn1_h'] = wn1[H:2 * H]
        lp['wn1_a'] = wn1[2 * H:]
        lp['wn2'], lp['bn2'] = _linear(next(keys), H, H)
        # pre_norm (LayerNorm)
        lp['gamma'] = jnp.ones((1, H), F32)
        lp['beta'] = jnp.zeros((1, H), F32)
        # mamba block (in_proj / x_proj / out_proj bias-free as in the reference impl)
        w_in, _ = _linear(next(keys), H, 2 * d_inner)
        lp['w_in_x'] = w_in[:, :d_inner]
        lp['w_in_z'] = w_in[:, d_inner:]
        lp['conv_w'] = 0.1 * jax.random.normal(next(keys), (d_conv, d_inner), F32)
        lp['conv_b'] = jnp.zeros((1, d_inner), F32)
        w_xproj, _ = _linear(next(keys), d_inner, dt_rank + 2 * d_state)
        lp['w_xdt'] = w_xproj[:, :dt_rank]
        lp['w_xB'] = w_xproj[:, dt_rank:dt_rank + d_state]
        lp['w_xC'] = w_xproj[:, dt_rank + d_state:]
        lp['w_dt'], lp['b_dt'] = _linear(next(keys), dt_rank, d_inner)
        A = jnp.tile(jnp.arange(1, d_state + 1, dtype=F32)[None, :], (d_inner, 1))
        lp['A_sd'] = (-A).T                                   # (d_state, d_inner) = -exp(A_log)^T
        lp['D'] = jnp.ones((1, d_inner), F32)
        lp['w_out'], _ = _linear(next(keys), d_inner, H)
        layers.append(lp)
    p['layers'] = layers

    p['wd1'], p['bd1'] = _linear(next(keys), H, H)
    p['wd2'], p['bd2'] = _linear(next(keys), H, H)
    p['wg1'], p['bg1'] = _linear(next(keys), H, H)
    p['wg2'], p['bg2'] = _linear(next(keys), H, 1)
    p['dims'] = dict(H=H, d_inner=d_inner, d_state=d_state, d_conv=d_conv, dt_rank=dt_rank)
    return p


# ----------------------------------------------------------------------------- forward
def egnn_forward(params, h0, coord, src, dst, edge_attr, node_mask, edge_mask, n_nodes):
    dims = params['dims']
    H, Ci, S, dc = dims['H'], dims['d_inner'], dims['d_state'], dims['d_conv']
    F0 = h0.shape[1]
    Ein = edge_attr.shape[1]
    N = h0.shape[0]
    G = N // n_nodes
    npad = ((n_nodes + 7) // 8) * 8          # sublane-aligned nodes per graph
    Np = G * npad
    # TODO(synk): when n_nodes % 8 != 0 the internal pad rows also flow through the Mamba
    # sequence (the PyTorch pipeline pads to max n_nodes upstream, so the sequence differs).

    # -------- plain-JAX glue (one-time layout work, no per-layer cost) --------
    def pad_nodes(a):
        if npad == n_nodes:
            return a
        a3 = a.reshape(G, n_nodes, a.shape[-1])
        a3 = jnp.pad(a3, ((0, 0), (0, npad - n_nodes), (0, 0)))
        return a3.reshape(G * npad, a.shape[-1])

    h0p = pad_nodes(h0)
    coordp = pad_nodes(coord)
    maskp = pad_nodes(node_mask)

    # densify COO edges into the per-graph (npad x npad) pairwise layout
    g_id = src // n_nodes
    li = src - g_id * n_nodes
    lj = dst - g_id * n_nodes
    flat = g_id * (npad * npad) + li * npad + lj
    eattr_d = jnp.zeros((G * npad * npad, Ein), F32).at[flat].set(edge_attr)
    emask_d = jnp.zeros((G * npad * npad, 1), F32).at[flat].set(edge_mask)

    # constant per-graph src/dst selection + aggregation operators (shared by all graphs/layers)
    eye = np.eye(npad, dtype=np.float32)
    Rs = jnp.asarray(np.repeat(eye, npad, axis=0))        # (np^2, np): edge i*np+j -> src i
    Rd = jnp.asarray(np.tile(eye, (npad, 1)))             # (np^2, np): edge i*np+j -> dst j
    Rst = jnp.asarray(np.repeat(eye, npad, axis=0).T)     # (np, np^2): segment-sum over src

    par = pltpu.CompilerParams(dimension_semantics=("parallel",))
    seq = pltpu.CompilerParams(dimension_semantics=("arbitrary",))

    # -------- embedding (grid over graphs, parallel) --------
    h = pl.pallas_call(
        _embed_kernel,
        out_shape=jax.ShapeDtypeStruct((Np, H), F32),
        grid=(G,),
        in_specs=[_rowblock(npad, F0),
                  _resident(params['w_emb'].shape),
                  _resident(params['b_emb'].shape)],
        out_specs=_rowblock(npad, H),
        compiler_params=par,
    )(h0p, params['w_emb'], params['b_emb'])

    # -------- per-layer GCL (graph-parallel) + Mamba (sequential chunked scan) --------
    def gcl(h_in, lp):
        args = (Rs, Rd, Rst, h_in, h0p, coordp, eattr_d, emask_d,
                lp['we1_hs'], lp['we1_hd'], lp['we1_r'], lp['we1_e'], lp['be1'],
                lp['we2'], lp['be2'],
                lp['wn1_mi'], lp['wn1_h'], lp['wn1_a'], lp['bn1'],
                lp['wn2'], lp['bn2'], lp['gamma'], lp['beta'])
        in_specs = [_resident(Rs.shape), _resident(Rd.shape), _resident(Rst.shape),
                    _rowblock(npad, H), _rowblock(npad, F0), _rowblock(npad, 3),
                    _rowblock(npad * npad, Ein), _rowblock(npad * npad, 1)]
        in_specs += [_resident(a.shape) for a in args[8:]]
        return pl.pallas_call(
            _gcl_kernel,
            out_shape=jax.ShapeDtypeStruct((Np, H), F32),
            grid=(G,),
            in_specs=in_specs,
            out_specs=_rowblock(npad, H),
            compiler_params=par,
        )(*args)

    T = _pick_chunk_tokens(G, npad)          # chunk tokens (multiple of 8, divides Np)
    nchunks = Np // T

    def mamba(h_in, lp):
        args = (h_in, lp['w_in_x'], lp['w_in_z'], lp['conv_w'], lp['conv_b'],
                lp['w_xdt'], lp['w_xB'], lp['w_xC'], lp['w_dt'], lp['b_dt'],
                lp['A_sd'], lp['D'], lp['w_out'])
        in_specs = [pl.BlockSpec((T, H), lambda c: (c, 0))]
        in_specs += [_resident(a.shape) for a in args[1:]]
        return pl.pallas_call(
            _mamba_kernel,
            out_shape=jax.ShapeDtypeStruct((Np, H), F32),
            grid=(nchunks,),
            in_specs=in_specs,
            out_specs=pl.BlockSpec((T, H), lambda c: (c, 0)),
            scratch_shapes=[
                pltpu.VMEM((S, Ci), F32),       # SSM state carried across chunks
                pltpu.VMEM((8, Ci), F32),       # causal-conv tail (last raw x rows)
                pltpu.VMEM((T, S, Ci), F32),    # dA for this chunk only
                pltpu.VMEM((T, S, Ci), F32),    # dB*x for this chunk only
                pltpu.VMEM((T, S, Ci), F32),    # per-token states for this chunk
            ],
            compiler_params=seq,
        )(*args)

    for lp in params['layers']:
        h = gcl(h, lp)
        h = mamba(h, lp)

    # -------- decode (grid over graphs, parallel; pooling = per-graph row sum) --------
    h3 = h.reshape(G, npad, H)
    mask3 = maskp.reshape(G, npad, 1)
    dec_args = (h3, mask3,
                params['wd1'], params['bd1'], params['wd2'], params['bd2'],
                params['wg1'], params['bg1'], params['wg2'], params['bg2'])
    dec_specs = [pl.BlockSpec((None, npad, H), lambda g: (g, 0, 0)),
                 pl.BlockSpec((None, npad, 1), lambda g: (g, 0, 0))]
    dec_specs += [_resident(a.shape) for a in dec_args[2:]]
    pred = pl.pallas_call(
        _decode_kernel,
        out_shape=jax.ShapeDtypeStruct((G, 1, 1), F32),
        grid=(G,),
        in_specs=dec_specs,
        out_specs=pl.BlockSpec((None, 1, 1), lambda g: (g, 0, 0)),
        compiler_params=par,
    )(*dec_args)
    return pred[:, 0, 0]


# ----------------------------------------------------------------------------- main
if __name__ == "__main__":
    key = jax.random.PRNGKey(0)
    in_node_nf, in_edge_nf, hidden_nf = 5, 4, 32
    n_layers = 2
    n_graphs, n_nodes = 2, 8
    N = n_graphs * n_nodes

    k_p, k_h, k_x, k_e = jax.random.split(key, 4)
    params = init_params(k_p, in_node_nf, in_edge_nf, hidden_nf, n_layers)

    h0 = jax.random.normal(k_h, (N, in_node_nf), F32)
    coord = jax.random.normal(k_x, (N, 3), F32)

    # fully connected edges (no self loops) within each graph
    src_list, dst_list = [], []
    for g in range(n_graphs):
        for i in range(n_nodes):
            for j in range(n_nodes):
                if i != j:
                    src_list.append(g * n_nodes + i)
                    dst_list.append(g * n_nodes + j)
    src = jnp.asarray(src_list, jnp.int32)
    dst = jnp.asarray(dst_list, jnp.int32)
    E = int(src.shape[0])

    edge_attr = jax.random.normal(k_e, (E, in_edge_nf), F32)

    # mask out the last node of each graph (padding)
    nm = np.ones((N, 1), np.float32)
    nm[n_nodes - 1, 0] = 0.0
    nm[N - 1, 0] = 0.0
    node_mask = jnp.asarray(nm)
    edge_mask = node_mask[src] * node_mask[dst]                 # (E, 1)

    pred = egnn_forward(params, h0, coord, src, dst, edge_attr,
                        node_mask, edge_mask, n_nodes)
    pred = jax.block_until_ready(pred)
    assert pred.shape == (n_graphs,) and bool(jnp.all(jnp.isfinite(pred)))
    print("KERNEL_OK")
</pallas_src>

<mosaic_0001>
module attributes {stable_mosaic.version = 11 : i64} {
  func.func @_embed_kernel(%arg0: i32, %arg1: memref<8x5xf32, #tpu.memory_space<vmem>>, %arg2: memref<5x32xf32, #tpu.memory_space<vmem>>, %arg3: memref<1x32xf32, #tpu.memory_space<vmem>>, %arg4: memref<8x32xf32, #tpu.memory_space<vmem>>) attributes {dimension_semantics = [#tpu.dimension_semantics<parallel>], iteration_bounds = array<i64: 2>, scalar_prefetch = 0 : i64, scratch_operands = 0 : i64, tpu.core_type = #tpu.core_type<tc>, window_params = [{transform_indices = @transform_0, window_bounds = array<i64: 8, 5>}, {pipeline_mode = #tpu.pipeline_mode<synchronous>, transform_indices = @transform_1, window_bounds = array<i64: 5, 32>}, {pipeline_mode = #tpu.pipeline_mode<synchronous>, transform_indices = @transform_2, window_bounds = array<i64: 1, 32>}, {transform_indices = @transform_3, window_bounds = array<i64: 8, 32>}]} {
    %c0 = arith.constant 0 : index
    %c0_0 = arith.constant 0 : index
    %0 = vector.load %arg1[%c0, %c0_0] : memref<8x5xf32, #tpu.memory_space<vmem>>, vector<8x5xf32>
    %c0_1 = arith.constant 0 : index
    %c0_2 = arith.constant 0 : index
    %1 = vector.load %arg2[%c0_1, %c0_2] : memref<5x32xf32, #tpu.memory_space<vmem>>, vector<5x32xf32>
    %cst = arith.constant dense<0.000000e+00> : vector<8x32xf32>
    %2 = tpu.matmul %0, %1, %cst {dimension_numbers = #tpu.dot_dimension_numbers<[1], [0], [0], [1], [0, 0, 1, 1], [], []>} : vector<8x5xf32>, vector<5x32xf32>, vector<8x32xf32> -> vector<8x32xf32>
    %c0_3 = arith.constant 0 : index
    %c0_4 = arith.constant 0 : index
    %3 = vector.load %arg3[%c0_3, %c0_4] : memref<1x32xf32, #tpu.memory_space<vmem>>, vector<1x32xf32>
    %4 = vector.broadcast %3 : vector<1x32xf32> to vector<8x32xf32>
    %5 = arith.addf %2, %4 : vector<8x32xf32>
    %c0_5 = arith.constant 0 : index
    %c0_6 = arith.constant 0 : index
    %6 = vector.load %arg4[%c0_5, %c0_6] : memref<8x32xf32, #tpu.memory_space<vmem>>, vector<8x32xf32>
    tpu.vector_store %arg4[%c0_5, %c0_6], %5 {strides = array<i32>} : memref<8x32xf32, #tpu.memory_space<vmem>>, vector<8x32xf32>,
    return
  }
  func.func @transform_0(%arg0: i32) -> (i32, i32) {
    %c0_i32 = arith.constant 0 : i32
    %c0_i32_0 = arith.constant 0 : i32
    return %arg0, %c0_i32 : i32, i32
  }
  func.func @transform_1(%arg0: i32) -> (i32, i32) {
    %c0_i32 = arith.constant 0 : i32
    %c0_i32_0 = arith.constant 0 : i32
    %c0_i32_1 = arith.constant 0 : i32
    return %c0_i32, %c0_i32_0 : i32, i32
  }
  func.func @transform_2(%arg0: i32) -> (i32, i32) {
    %c0_i32 = arith.constant 0 : i32
    %c0_i32_0 = arith.constant 0 : i32
    %c0_i32_1 = arith.constant 0 : i32
    return %c0_i32, %c0_i32_0 : i32, i32
  }
  func.func @transform_3(%arg0: i32) -> (i32, i32) {
    %c0_i32 = arith.constant 0 : i32
    %c0_i32_0 = arith.constant 0 : i32
    return %arg0, %c0_i32 : i32, i32
  }
}

</mosaic_0001>

<llo_original>
// kernel: tpu_custom_call.1
$region0: #{tpu_custom_call.1}
  #allocation0 [shape = 'u32[]', space=smem, size = 0x4, offset = 0x4, fixed_abs, tag = 'smem constant byte address 0x4 - core index']
  #allocation1 [shape = 'u32[72,128]{1,0:T(1,128)}', space=vmem, size = 0x9000, scoped, tag = 'internal scratch']
  %s0 = inlined_call_operand.vmem [shape: f32[16,5], index: 0, kind: input, shape index: {}]
  %s1 = inlined_call_operand.vmem [shape: f32[5,32], index: 1, kind: input, shape index: {}]
  %s2 = inlined_call_operand.vmem [shape: f32[1,32], index: 2, kind: input, shape index: {}]
  %s3 = inlined_call_operand.hbm [shape: f32[16,32], index: 3, kind: output, shape index: {}]
  %s4 = sld [smem:[#allocation0]]
  $region45: #{tpu_custom_call.1} parent=0
    _
  %s6 = ssub.s32 1, %s4
  %s7 = scalar_select 0, %s6, %s4
  $region1: #{tpu_custom_call.1} parent=0
    #allocation2 [shape = 'u8[8192]{0}', space=vmem, size = 0x2000, scoped, tag = 'output window, operand 0']
    #allocation3 [shape = 's32[2]{0}', space=sflag, size = 0x8, scoped, tag = 'scoped memory for tpu_custom_call.1']
    %8 = vsyncpa [#allocation3], 0
    %s9 = scalar_lea.sflag [#allocation3], 1
    %10 = vsyncpa %s9, 0
    loop: start=0, step=1, limit=4
    $region2: #{tpu_custom_call.1} parent=1 // loop_pre_header
      _
    $region3: #{tpu_custom_call.1} parent=1 // loop_header
      %s12 = sphi 0, %s16
      %p13 = scmp.ge.s32.totalorder %s12, 4
      %s22 = sphi 0, %s24
      %s25 = sphi 0, %s22
      %s26 = sphi 0, %s25
      %s42 = sphi 0, %s26
      %s46 = sphi 0, %s46
      %s48 = sphi 0, %s46
      %s49 = sphi 0, %s48
      %s63 = sphi 0, %s49
      %s67 = sphi 0, %s67
      %s69 = sphi 0, %s67
      %s70 = sphi 0, %s69
      %s84 = sphi 0, %s70
      %s90 = sphi 0, %s92
      %s93 = sphi 0, %s90
      %s94 = sphi 0, %s93
      %s110 = sphi 0, %s94
    $region4: #{tpu_custom_call.1} parent=1 // loop_header_branch
      %15 = sbr.rel (%p13) target = $region8
    $region5: #{tpu_custom_call.1} parent=1 // loop_body
      %s17 = ssub.s32 %s12, 1
      %s18 = ssub.s32 %s12, 2
      %s19 = sadd.s32 %s12, 1
      %s20 = ssub.s32 %s12, %s19
      %p21 = scmp.eq.s32.totalorder %s20, 0
      %s23 = sadd.s32 %s22, 1
      %s24 = scalar_select %p21, %s22, %s23
      %p27 = pneg %p21
      %p28 = scmp.eq.s32.totalorder %s12, 1
      %p29 = por %p27, %p28
      %p30 = scmp.ne.s32.totalorder %s22, %s25
      %p31 = scmp.eq.s32.totalorder %s12, 0
      %p32 = por %p30, %p31
      %p33 = scmp.ne.s32.totalorder %s22, %s25
      %p34 = scmp.eq.s32.totalorder %s17, 1
      %p35 = por %p33, %p34
      %p36 = scmp.ne.s32.totalorder %s25, %s26
      %p37 = scmp.eq.s32.totalorder %s17, 0
      %p38 = por %p36, %p37
      %p39 = scmp.ne.s32.totalorder %s25, %s26
      %p40 = scmp.eq.s32.totalorder %s18, 1
      %p41 = por %p39, %p40
      %p43 = scmp.ne.s32.totalorder %s26, %s42
      %p44 = scmp.eq.s32.totalorder %s18, 0
      %p45 = por %p43, %p44
      %s47 = sadd.s32 %s46, 1
      %p50 = scmp.eq.s32.totalorder %s12, 1
      %p51 = scmp.ne.s32.totalorder %s46, %s48
      %p52 = scmp.eq.s32.totalorder %s12, 0
      %p53 = por %p51, %p52
      %p54 = scmp.ne.s32.totalorder %s46, %s48
      %p55 = scmp.eq.s32.totalorder %s17, 1
      %p56 = por %p54, %p55
      %p57 = scmp.ne.s32.totalorder %s48, %s49
      %p58 = scmp.eq.s32.totalorder %s17, 0
      %p59 = por %p57, %p58
      %p60 = scmp.ne.s32.totalorder %s48, %s49
      %p61 = scmp.eq.s32.totalorder %s18, 1
      %p62 = por %p60, %p61
      %p64 = scmp.ne.s32.totalorder %s49, %s63
      %p65 = scmp.eq.s32.totalorder %s18, 0
      %p66 = por %p64, %p65
      %s68 = sadd.s32 %s67, 1
      %p71 = scmp.eq.s32.totalorder %s12, 1
      %p72 = scmp.ne.s32.totalorder %s67, %s69
      %p73 = scmp.eq.s32.totalorder %s12, 0
      %p74 = por %p72, %p73
      %p75 = scmp.ne.s32.totalorder %s67, %s69
      %p76 = scmp.eq.s32.totalorder %s17, 1
      %p77 = por %p75, %p76
      %p78 = scmp.ne.s32.totalorder %s69, %s70
      %p79 = scmp.eq.s32.totalorder %s17, 0
      %p80 = por %p78, %p79
      %p81 = scmp.ne.s32.totalorder %s69, %s70
      %p82 = scmp.eq.s32.totalorder %s18, 1
      %p83 = por %p81, %p82
      %p85 = scmp.ne.s32.totalorder %s70, %s84
      %p86 = scmp.eq.s32.totalorder %s18, 0
      %p87 = por %p85, %p86
      %s88 = ssub.s32 %s12, %s19
      %p89 = scmp.eq.s32.totalorder %s88, 0
      %s91 = sadd.s32 %s90, 1
      %s92 = scalar_select %p89, %s90, %s91
      %p95 = pneg %p89
      %p96 = scmp.eq.s32.totalorder %s12, 1
      %p97 = por %p95, %p96
      %p98 = scmp.ne.s32.totalorder %s90, %s93
      %p99 = scmp.eq.s32.totalorder %s12, 0
      %p100 = por %p98, %p99
      %p101 = scmp.ne.s32.totalorder %s90, %s93
      %p102 = scmp.eq.s32.totalorder %s17, 1
      %p103 = por %p101, %p102
      %p104 = scmp.ne.s32.totalorder %s93, %s94
      %p105 = scmp.eq.s32.totalorder %s17, 0
      %p106 = por %p104, %p105
      %p107 = scmp.ne.s32.totalorder %s93, %s94
      %p108 = scmp.eq.s32.totalorder %s18, 1
      %p109 = por %p107, %p108
      %p111 = scmp.ne.s32.totalorder %s94, %s110
      %p112 = scmp.eq.s32.totalorder %s18, 0
      %p113 = por %p111, %p112
      %p114 = scmp.le.s32.totalorder 1, %s12
      %p115 = scmp.lt.s32.totalorder %s12, 3
      %p116 = pnand %p114, %p115
      %p117 = pneg %p116
      // Predicated region
      $region9: #{tpu_custom_call.1} parent=5 // pred_check
        _
      $region10: #{tpu_custom_call.1} parent=5 // pred_check_branch
        %119 = sbr.rel (%p116) target = $region12
      $region11: #{tpu_custom_call.1} parent=5 // pred_region
        %s120 = ssub.s32 %s12, 1
        // Predicated region
        $region13: #{tpu_custom_call.1} parent=11 // pred_check
          %p121 = pneg %p59
        $region14: #{tpu_custom_call.1} parent=11 // pred_check_branch
          %123 = sbr.rel (%p121) target = $region16
        $region15: #{tpu_custom_call.1} parent=11 // pred_region
          _
        $region16: #{tpu_custom_call.1} parent=11 // pred_fallthru
          _
        // Predicated region
        $region17: #{tpu_custom_call.1} parent=11 // pred_check
          %p124 = pneg %p80
        $region18: #{tpu_custom_call.1} parent=11 // pred_check_branch
          %126 = sbr.rel (%p124) target = $region20
        $region19: #{tpu_custom_call.1} parent=11 // pred_region
          _
        $region20: #{tpu_custom_call.1} parent=11 // pred_fallthru
          _
      $region12: #{tpu_custom_call.1} parent=5 // pred_fallthru
        _
      %p127 = scmp.lt.s32.totalorder %s12, 2
      // Predicated region
      $region21: #{tpu_custom_call.1} parent=5 // pred_check
        %p128 = pneg %p127
      $region22: #{tpu_custom_call.1} parent=5 // pred_check_branch
        %130 = sbr.rel (%p128) target = $region24
      $region23: #{tpu_custom_call.1} parent=5 // pred_region
        // Predicated region
        $region25: #{tpu_custom_call.1} parent=23 // pred_check
          %p131 = pneg %p32
        $region26: #{tpu_custom_call.1} parent=23 // pred_check_branch
          %133 = sbr.rel (%p131) target = $region28
        $region27: #{tpu_custom_call.1} parent=23 // pred_region
          %p134 = scmp.lt.s32.totalorder %s12, 1
          %s135 = scalar_select %p134, %s12, 1
          %s136 = smul.addr %s135, 8
          %s137 = scalar_lea.vmem %s0, %s136
        $region28: #{tpu_custom_call.1} parent=23 // pred_fallthru
          _
      $region24: #{tpu_custom_call.1} parent=5 // pred_fallthru
        _
      %p138 = scmp.le.s32.totalorder 1, %s12
      %p139 = scmp.lt.s32.totalorder %s12, 3
      %p140 = pnand %p138, %p139
      %p141 = pneg %p140
      // Predicated region
      $region29: #{tpu_custom_call.1} parent=5 // pred_check
        _
      $region30: #{tpu_custom_call.1} parent=5 // pred_check_branch
        %143 = sbr.rel (%p140) target = $region32
      $region31: #{tpu_custom_call.1} parent=5 // pred_region
        %s144 = ssub.s32 %s12, 1
        %p145 = scmp.lt.s32.totalorder %s17, 1
        %s146 = scalar_select %p145, %s17, 1
        %s147 = smul.addr %s146, 8
        %s148 = scalar_lea.vmem %s0, %s147
        %p149 = pneg %p38
        %p150 = pneg %p35
        %p151 = pneg %p59
        %p152 = pneg %p56
        %p153 = pneg %p80
        %p154 = pneg %p77
        %p155 = pneg %p106
        %p156 = pneg %p103
        %s157 = sand.u32 %s93, 1
        %s158 = scalar_lea.sflag [#allocation3], %s157
        %s159 = sand.u32 %s93, 1
        %s160 = smul.addr %s159, 8
        %s161 = scalar_lea.vmem [#allocation2], %s160
        %p162 = scmp.lt.s32.totalorder %s17, 1
        %s163 = scalar_select %p162, %s17, 1
        %s164 = smul.addr %s163, 8
        %s165 = scalar_lea.vmem %s0, %s164
        %v166 = vld [vmem:[%s165] sm:$0xff]
        %v167 = vld [vmem:[%s1] sm:$0x1f]
        %v168 = vld [vmem:[%s2] sm:$0x1]
        %v170 = vperm.slane %v168, 0
        %vm172 = vcmask 39936
        %v174 = vsel %vm172, %v166, 0
        %vm176 = vcmask 1044480
        %v178 = vsel %vm176, %v167, 0
        %180 = vmatpush.msra.mxu0 0.0
        %181 = vmatpush.msra.mxu0 0.0
        %182 = vmatpush.msra.mxu0 0.0
        %183 = vmatpush.msra.mxu0 0.0
        %184 = vmatpush.msra.mxu0 0.0
        %185 = vmatpush.msra.mxu0 0.0
        %186 = vmatpush.msra.mxu0 0.0
        %187 = vmatpush.msra.mxu0 0.0
        %188 = vmatpush.msra.mxu0 0.0
        %189 = vmatpush.msra.mxu0 0.0
        %190 = vmatpush.msra.mxu0 0.0
        %191 = vmatpush.msra.mxu0 0.0
        %192 = vmatpush.msra.mxu0 0.0
        %193 = vmatpush.msra.mxu0 0.0
        %194 = vmatpush.msra.mxu0 0.0
        %195 = vmatpush.msra.mxu0 %v178
        %196 = vmatmul.f32.gmra.mxu0 %v174
        %v197 = vpop.f32.mrf.mxu0
        %v198 = vadd.f32 %v170, %v197
        %199 = vdwg.mxu0
        %vm200 = vcmask 261120
        %201 = vst.msk [vmem:[%s161] sm:$0xff] %vm200, %v198
        %s202 = sand.u32 %s93, 1
        %s203 = scalar_lea.sflag [#allocation3], %s202
        %s204 = sand.u32 %s93, 1
        %s205 = smul.addr %s204, 8
        %s206 = scalar_lea.vmem [#allocation2], %s205
        // Predicated region
        $region33: #{tpu_custom_call.1} parent=31 // pred_check
          %p207 = pneg %p103
        $region34: #{tpu_custom_call.1} parent=31 // pred_check_branch
          %209 = sbr.rel (%p207) target = $region36
        $region35: #{tpu_custom_call.1} parent=31 // pred_region
          %211 = vsyncadd %s203, 0
          %s212 = smul.addr %s17, 8
          %s213 = scalar_lea.hbm %s3, %s212
          %s215 = sshll.u32 %s206, 4
          %s216 = int_to_ptr.vmem [resolvable:$true] %s215
          %s217 = sshll.u32 %s213, 4
          %s218 = int_to_ptr.hbm [resolvable:$true] %s217
          %220 = dma.vmem_to_hbm [thread:$0]  %s216, 128, %s218, %s203
        $region36: #{tpu_custom_call.1} parent=31 // pred_fallthru
          _
      $region32: #{tpu_custom_call.1} parent=5 // pred_fallthru
        _
      %p221 = scmp.le.s32.totalorder 2, %s12
      // Predicated region
      $region37: #{tpu_custom_call.1} parent=5 // pred_check
        %p222 = pneg %p221
      $region38: #{tpu_custom_call.1} parent=5 // pred_check_branch
        %224 = sbr.rel (%p222) target = $region40
      $region39: #{tpu_custom_call.1} parent=5 // pred_region
        %s225 = ssub.s32 %s12, 2
        // Predicated region
        $region41: #{tpu_custom_call.1} parent=39 // pred_check
          %p226 = pneg %p109
        $region42: #{tpu_custom_call.1} parent=39 // pred_check_branch
          %228 = sbr.rel (%p226) target = $region44
        $region43: #{tpu_custom_call.1} parent=39 // pred_region
          %s229 = sand.u32 %s94, 1
          %s230 = scalar_lea.sflag [#allocation3], %s229
          %s231 = sand.u32 %s94, 1
          %s232 = smul.addr %s231, 8
          %s233 = scalar_lea.vmem [#allocation2], %s232
          %235 = dma.done %s230, 128
        $region44: #{tpu_custom_call.1} parent=39 // pred_fallthru
          _
      $region40: #{tpu_custom_call.1} parent=5 // pred_fallthru
        _
    $region6: #{tpu_custom_call.1} parent=1 // loop_footer
      %s16 = sadd.s32 1, %s12
    $region7: #{tpu_custom_call.1} parent=1 // loop_footer_branch
      %11 = sbr.rel target = $region3
    $region8: #{tpu_custom_call.1} parent=1 // loop_exit
      _
    %236 = vsyncpa [#allocation3], 1
    %s237 = scalar_lea.sflag [#allocation3], 1
    %238 = vsyncpa %s237, 1

</llo_original>
